<compile_context>
chip_gen: v7x
topology: tpu7x:2x2x1
jax: 0.10.0
libtpu: 0.0.40
codegen_flags: <defaults>
</compile_context>

<pallas_src>
import jax
import jax.numpy as jnp
from jax.experimental import pallas as pl
from jax.experimental.pallas import tpu as pltpu


_TARGET_BLOCK_BYTES = 4 * 1024 * 1024  # ~4 MiB per x/out block


def _add_pos_kernel(x_ref, pe_ref, o_ref):
    # x_ref/o_ref: (rb, cb) tile; pe_ref: (1, cb), broadcast over the row axis.
    o_ref[...] = x_ref[...] + pe_ref[...]


def _vmem_limit_bytes():
    try:
        info = pltpu.get_tpu_info()
        cap = getattr(info, "vmem_capacity_bytes", None)
        if cap:
            return int(min(cap * 3 // 4, 96 * 1024 * 1024))
    except Exception:
        pass
    return 48 * 1024 * 1024  # conservative: within physical VMEM on every generation


def _largest_divisor_multiple(n, base, limit):
    """Largest divisor of n that is a multiple of `base` and <= limit (or None)."""
    best = None
    d = base
    limit = min(n, limit)
    while d <= limit:
        if n % d == 0:
            best = d
        d += base
    return best


def _choose_blocks(B, F, itemsize):
    # Sublane packing: 8 rows for 4-byte, 16 for 2-byte, 32 for 1-byte dtypes.
    sublane = {4: 8, 2: 16, 1: 32}.get(itemsize, 8)

    # Column (lane) block along flattened T*D: full extent unless even a
    # `sublane`-row slab would blow the budget; then the largest 128-multiple
    # divisor that fits (falls back to full extent, which is always legal).
    if F * itemsize * sublane <= _TARGET_BLOCK_BYTES or F % 128 != 0:
        cb = F
    else:
        cb = _largest_divisor_multiple(
            F, 128, max(128, _TARGET_BLOCK_BYTES // (sublane * itemsize))) or F

    # Row (sublane) block along B: divisor of B, multiple of `sublane` (or == B),
    # sized to the byte budget; prefer leaving >= 2 total grid steps (megacore).
    max_rows = max(1, _TARGET_BLOCK_BYTES // (cb * itemsize))
    candidates = [d for d in range(1, B + 1)
                  if B % d == 0 and (d % sublane == 0 or d == B) and d <= max_rows]
    n_col_steps = F // cb
    prefer = [d for d in candidates if (B // d) * n_col_steps >= 2]
    if prefer:
        rb = max(prefer)
    elif candidates:
        rb = max(candidates)
    else:
        rb = B  # full extent along B is always a legal block shape
    return rb, cb


def abs_positional_encoding_1d(x, abs_pos_enc):
    """x: (B, T, D); abs_pos_enc: (1, T, D). Returns x + pos_enc broadcast over B."""
    B, T, D = x.shape
    assert abs_pos_enc.shape == (1, T, D)
    F = T * D

    # Lane-dense 2-D views (free reshapes: contiguous memory).
    x2 = x.reshape(B, F)
    pe2 = abs_pos_enc.reshape(1, F).astype(x.dtype)

    rb, cb = _choose_blocks(B, F, x2.dtype.itemsize)

    out2 = pl.pallas_call(
        _add_pos_kernel,
        out_shape=jax.ShapeDtypeStruct((B, F), x.dtype),
        grid=(B // rb, F // cb),
        in_specs=[
            pl.BlockSpec((rb, cb), lambda i, j: (i, j)),  # x tile
            pl.BlockSpec((1, cb), lambda i, j: (0, j)),   # pos-enc: constant row block,
                                                          # fetched once per core
        ],
        out_specs=pl.BlockSpec((rb, cb), lambda i, j: (i, j)),
        compiler_params=pltpu.CompilerParams(
            dimension_semantics=("parallel", "parallel"),
            vmem_limit_bytes=_vmem_limit_bytes(),
        ),
    )(x2, pe2)

    return out2.reshape(B, T, D)


if __name__ == "__main__":
    # Small shapes consistent with the module: batch=2, tokens=8, dim=32.
    B, T, D = 2, 8, 32

    key = jax.random.PRNGKey(0)
    k_param, k_x = jax.random.split(key)

    # Deterministic "torch.randn(1, tokens, dim)" equivalent parameter init.
    abs_pos_enc = jax.random.normal(k_param, (1, T, D), dtype=jnp.float32)
    x = jax.random.normal(k_x, (B, T, D), dtype=jnp.float32)

    out = jax.block_until_ready(abs_positional_encoding_1d(x, abs_pos_enc))

    # Reference check (plain JAX broadcast add).
    ref = x + abs_pos_enc
    assert out.shape == (B, T, D)
    assert jnp.allclose(out, ref, atol=1e-6), "mismatch vs reference"

    print("KERNEL_OK")
</pallas_src>

<mosaic_0001>
module attributes {stable_mosaic.version = 11 : i64} {
  func.func @_add_pos_kernel(%arg0: i32, %arg1: i32, %arg2: memref<2x256xf32, #tpu.memory_space<vmem>>, %arg3: memref<1x256xf32, #tpu.memory_space<vmem>>, %arg4: memref<2x256xf32, #tpu.memory_space<vmem>>) attributes {dimension_semantics = [#tpu.dimension_semantics<parallel>, #tpu.dimension_semantics<parallel>], iteration_bounds = array<i64: 1, 1>, scalar_prefetch = 0 : i64, scratch_operands = 0 : i64, tpu.core_type = #tpu.core_type<tc>, window_params = [{transform_indices = @transform_0, window_bounds = array<i64: 2, 256>}, {transform_indices = @transform_1, window_bounds = array<i64: 1, 256>}, {transform_indices = @transform_2, window_bounds = array<i64: 2, 256>}]} {
    %c0 = arith.constant 0 : index
    %c0_0 = arith.constant 0 : index
    %0 = vector.load %arg2[%c0, %c0_0] : memref<2x256xf32, #tpu.memory_space<vmem>>, vector<2x256xf32>
    %c0_1 = arith.constant 0 : index
    %c0_2 = arith.constant 0 : index
    %1 = vector.load %arg3[%c0_1, %c0_2] : memref<1x256xf32, #tpu.memory_space<vmem>>, vector<1x256xf32>
    %2 = vector.broadcast %1 : vector<1x256xf32> to vector<2x256xf32>
    %3 = arith.addf %0, %2 : vector<2x256xf32>
    %c0_3 = arith.constant 0 : index
    %c0_4 = arith.constant 0 : index
    %4 = vector.load %arg4[%c0_3, %c0_4] : memref<2x256xf32, #tpu.memory_space<vmem>>, vector<2x256xf32>
    tpu.vector_store %arg4[%c0_3, %c0_4], %3 {strides = array<i32>} : memref<2x256xf32, #tpu.memory_space<vmem>>, vector<2x256xf32>,
    return
  }
  func.func @transform_0(%arg0: i32, %arg1: i32) -> (i32, i32) {
    %c0_i32 = arith.constant 0 : i32
    return %arg0, %arg1 : i32, i32
  }
  func.func @transform_1(%arg0: i32, %arg1: i32) -> (i32, i32) {
    %c0_i32 = arith.constant 0 : i32
    %c0_i32_0 = arith.constant 0 : i32
    return %c0_i32, %arg1 : i32, i32
  }
  func.func @transform_2(%arg0: i32, %arg1: i32) -> (i32, i32) {
    %c0_i32 = arith.constant 0 : i32
    return %arg0, %arg1 : i32, i32
  }
}

</mosaic_0001>

<llo_original>
// kernel: tpu_custom_call.1
$region0: #{tpu_custom_call.1}
  #allocation0 [shape = 'u32[]', space=smem, size = 0x4, offset = 0x4, fixed_abs, tag = 'smem constant byte address 0x4 - core index']
  #allocation1 [shape = 'u32[144,128]{1,0:T(1,128)}', space=vmem, size = 0x12000, scoped, tag = 'internal scratch']
  %s0 = inlined_call_operand.hbm [shape: f32[2,256], index: 0, kind: input, shape index: {}]
  %s1 = inlined_call_operand.vmem [shape: f32[1,256], index: 1, kind: input, shape index: {}]
  %s2 = inlined_call_operand.hbm [shape: f32[2,256], index: 2, kind: output, shape index: {}]
  %s3 = sld [smem:[#allocation0]]
  $region22: #{tpu_custom_call.1} parent=0
    _
  %s5 = ssub.s32 1, %s3
  %s6 = scalar_select 0, %s5, %s3
  $region1: #{tpu_custom_call.1} parent=0
    #allocation2 [shape = 'u8[2048]{0}', space=vmem, size = 0x800, scoped, tag = 'input window, operand 0, single buffered']
    #allocation3 [shape = 's32[1]{0}', space=sflag, size = 0x4, scoped, tag = 'scoped memory for tpu_custom_call.1']
    #allocation4 [shape = 's32[1]{0}', space=sflag, size = 0x4, scoped, tag = 'scoped memory for tpu_custom_call.1']
    #allocation5 [shape = 'u8[2048]{0}', space=vmem, size = 0x800, scoped, tag = 'output window, operand 0, single buffered']
    %7 = vsyncpa [#allocation3], 0
    %8 = vsyncpa [#allocation4], 0
    // Predicated region
    $region2: #{tpu_custom_call.1} parent=1 // pred_check
      _
    $region3: #{tpu_custom_call.1} parent=1 // pred_check_branch
      %10 = sbr.rel (0) target = $region5
    $region4: #{tpu_custom_call.1} parent=1 // pred_region
      %s12 = ssub.s32 64, 64
      %13 = vsyncadd [#allocation3], %s12
      %s15 = sshll.u32 [#allocation2], 4
      %s16 = int_to_ptr.vmem [resolvable:$true] %s15
      %18 = dma.hbm_to_vmem [thread:$0]  %s0, 64, %s16, [#allocation3]
    $region5: #{tpu_custom_call.1} parent=1 // pred_fallthru
      _
    // Predicated region
    $region6: #{tpu_custom_call.1} parent=1 // pred_check
      _
    $region7: #{tpu_custom_call.1} parent=1 // pred_check_branch
      %20 = sbr.rel (0) target = $region9
    $region8: #{tpu_custom_call.1} parent=1 // pred_region
      _
    $region9: #{tpu_custom_call.1} parent=1 // pred_fallthru
      _
    // Predicated region
    $region10: #{tpu_custom_call.1} parent=1 // pred_check
      _
    $region11: #{tpu_custom_call.1} parent=1 // pred_check_branch
      %22 = sbr.rel (0) target = $region13
    $region12: #{tpu_custom_call.1} parent=1 // pred_region
      %23 = dma.done [#allocation3], 64
    $region13: #{tpu_custom_call.1} parent=1 // pred_fallthru
      _
    %v24 = vld [vmem:[#allocation2] sm:$0xf]
    %v25 = vld [vmem:[%s1] sm:$0x3]
    %v27 = vlaneseq
    %v28 = vshrl.u32 %v27, 7
    %v29 = vsub.s32 0, %v28
    %v30 = vrot.slane %v25, %v29
    %v31 = vlaneseq
    %v32 = vshrl.u32 %v31, 7
    %v33 = vsub.s32 1, %v32
    %v34 = vrot.slane %v25, %v33
    %v35 = vcombine.low %v30, %v34
    %v37 = vunpack.c.l.s4 1983009808
    %v38 = vunpack.c.0.s8 %v37
    %v39 = vlaneseq
    %v40 = vshrl.u32 %v39, 7
    %v41 = vsub.s32 %v38, %v40
    %v42 = vrot.slane %v35, %v41
    %v44 = vadd.f32 %v24, %v42
    %45 = vst [vmem:[#allocation5] sm:$0xf] %v44
    // Predicated region
    $region14: #{tpu_custom_call.1} parent=1 // pred_check
      _
    $region15: #{tpu_custom_call.1} parent=1 // pred_check_branch
      %47 = sbr.rel (0) target = $region17
    $region16: #{tpu_custom_call.1} parent=1 // pred_region
      %s49 = ssub.s32 64, 64
      %50 = vsyncadd [#allocation4], %s49
      %s52 = sshll.u32 [#allocation5], 4
      %s53 = int_to_ptr.vmem [resolvable:$true] %s52
      %55 = dma.vmem_to_hbm [thread:$0]  %s53, 64, %s2, [#allocation4]
    $region17: #{tpu_custom_call.1} parent=1 // pred_fallthru
      _
    // Predicated region
    $region18: #{tpu_custom_call.1} parent=1 // pred_check
      _
    $region19: #{tpu_custom_call.1} parent=1 // pred_check_branch
      %57 = sbr.rel (0) target = $region21
    $region20: #{tpu_custom_call.1} parent=1 // pred_region
      %58 = dma.done [#allocation4], 64
    $region21: #{tpu_custom_call.1} parent=1 // pred_fallthru
      _
    %59 = vsyncpa [#allocation3], 1
    %60 = vsyncpa [#allocation4], 1

</llo_original>
